<compile_context>
chip_gen: v7x
topology: tpu7x:2x2x1
jax: 0.10.0
libtpu: 0.0.40
codegen_flags: <defaults>
</compile_context>

<pallas_src>
import math

import jax
import jax.numpy as jnp
from jax.experimental import pallas as pl
from jax.experimental.pallas import tpu as pltpu


def simple_attention_kernel(
    x_ref,      # (TB, N, D)   fp32 input tile (unpadded feature dim)
    w01_ref,    # (2, D, Dp)   bf16: [lin_proj W, ffn[0] W with eval-BN folded]
    w2_ref,     # (Dp, D)      bf16: ffn[3] weight
    vec_ref,    # (3, Dp)      fp32: [lin_proj bias, attention weights, ffn[0] bias]
    b2_ref,     # (1, D)       fp32: ffn[3] bias
    out_ref,    # (TB, D)      fp32 output tile
):
    tb, n, d = x_ref.shape
    dp = w01_ref.shape[-1]

    x = x_ref[...]                                   # (TB, N, D) fp32
    xb = x.astype(jnp.bfloat16)

    wp = w01_ref[0]                                  # (D, Dp) bf16
    w1 = w01_ref[1]                                  # (D, Dp) bf16
    bp = vec_ref[0:1, :]                             # (1, Dp) fp32
    aw = vec_ref[1:2, :]                             # (1, Dp) fp32
    b1 = vec_ref[2:3, :]                             # (1, Dp) fp32

    # ---- lin_proj + ReLU.  Collapsing (TB, N) into one tall M is a layout
    # no-op when N % 8 == 0 (true here); padded out-lanes get 0 + 0 -> relu -> 0.
    h = jnp.dot(xb.reshape(tb * n, d), wp,
                preferred_element_type=jnp.float32)  # (TB*N, Dp)
    h = jnp.maximum(h + bp, 0.0).reshape(tb, n, dp)

    # ---- attention logits: VPU multiply + lane (XLU) reduce; padded lanes are 0.
    s = jnp.sum(h * aw, axis=-1)                     # (TB, N)

    # ---- softmax over the token dim (dim=1)
    m = jnp.max(s, axis=1, keepdims=True)
    e = jnp.exp(s - m)
    p = e / jnp.sum(e, axis=1, keepdims=True)        # (TB, N)

    # ---- einsum('bij,bik->bj'): weighted token sum.  N is small & static, so a
    # VPU multiply + cross-sublane reduce beats an M=1 batched MXU matvec.
    # TODO(synk): Dropout(p=0.5) / training-mode BatchNorm batch statistics are
    # stochastic; eval-mode semantics (identity dropout, running stats) implemented.
    pooled = jnp.sum(p[:, :, None] * x, axis=1)      # (TB, D) fp32

    # ---- ffn: Linear(+folded eval BatchNorm) -> ReLU -> Linear
    y = jnp.dot(pooled.astype(jnp.bfloat16), w1,
                preferred_element_type=jnp.float32) + b1
    y = jnp.maximum(y, 0.0)                          # (TB, Dp), padded lanes 0
    y = jnp.dot(y.astype(jnp.bfloat16), w2_ref[...],
                preferred_element_type=jnp.float32) + b2_ref[...]

    out_ref[...] = y.astype(out_ref.dtype)           # (TB, D)


def _round_up(v, m):
    return ((v + m - 1) // m) * m


def _pad2(a, rows, cols):
    return jnp.pad(a, ((0, rows - a.shape[0]), (0, cols - a.shape[1])))


def prepare_params(params):
    """One-time host-side parameter prep: fold eval-BN, pad, stack, cast bf16."""
    D = params["wp"].shape[0]
    Dp = _round_up(D, 128)                             # lane-dense intermediate width

    # Fold eval-mode BatchNorm1d (eps=1e-12 per the module) into ffn[0].
    inv = params["gamma"] * jax.lax.rsqrt(params["rv"] + 1e-12)   # (1, D)
    w1f = params["w1"] * inv                                      # scale out-columns
    b1f = (params["b1"] - params["rm"]) * inv + params["beta"]

    w01 = jnp.stack([_pad2(params["wp"], D, Dp),
                     _pad2(w1f, D, Dp)]).astype(jnp.bfloat16)     # (2, D, Dp)
    w2 = jnp.pad(params["w2"],
                 ((0, Dp - D), (0, 0))).astype(jnp.bfloat16)      # (Dp, D)
    vec = jnp.concatenate([_pad2(params["bp"], 1, Dp),
                           _pad2(params["aw"].reshape(1, D), 1, Dp),
                           _pad2(b1f, 1, Dp)], axis=0)            # (3, Dp) fp32
    return {"w01": w01, "w2": w2, "vec": vec, "b2": params["b2"]}


def _choose_batch_tile_and_vmem(B, N, D, Dp, weight_bytes):
    """Generation-aware batch tile + explicit scoped-VMEM limit."""
    try:
        vmem_cap = int(pltpu.get_tpu_info().vmem_capacity_bytes)
    except Exception:
        vmem_cap = 64 * 1024 * 1024        # conservative: v7x per-core physical VMEM
    vmem_limit = min(vmem_cap // 2, 64 * 1024 * 1024)   # leave headroom for the compiler
    # Per-batch-row VMEM: double-buffered x/out tiles + dominant kernel temporaries.
    per_row = (2 * N * D * 4        # x tile, double-buffered, fp32
               + 2 * D * 4          # out tile, double-buffered
               + N * D * 2          # bf16 copy of x
               + 2 * N * Dp * 4     # h (fp32) + fused-temporary headroom
               + 4 * Dp * 4)        # pooled / y / broadcast temps
    rows = max(0, vmem_limit * 3 // 4 - weight_bytes) // per_row
    if rows >= B:
        return B, vmem_limit
    # Align M = batch_tile * N to 256 for the 256x256 MXUs (v6e/v7x); >= 8 rows.
    align = max(8, 256 // math.gcd(256, N))
    bt = max((rows // align) * align, 8)
    return min(bt, B), vmem_limit


def _build_call(B, N, D, Dp, batch_tile, vmem_limit, single_buffer_weights):
    # Grid-invariant weights: their block index never changes, so double-buffering
    # them only wastes VMEM -> request a single buffer when supported.
    wkw = {"pipeline_mode": pl.Buffered(1)} if single_buffer_weights else {}
    return pl.pallas_call(
        simple_attention_kernel,
        out_shape=jax.ShapeDtypeStruct((B, D), jnp.float32),
        grid=(pl.cdiv(B, batch_tile),),
        in_specs=[
            pl.BlockSpec((batch_tile, N, D), lambda i: (i, 0, 0)),
            pl.BlockSpec((2, D, Dp), lambda i: (0, 0, 0), **wkw),
            pl.BlockSpec((Dp, D), lambda i: (0, 0), **wkw),
            pl.BlockSpec((3, Dp), lambda i: (0, 0), **wkw),
            pl.BlockSpec((1, D), lambda i: (0, 0), **wkw),
        ],
        out_specs=pl.BlockSpec((batch_tile, D), lambda i: (i, 0)),
        compiler_params=pltpu.CompilerParams(
            dimension_semantics=("parallel",),
            vmem_limit_bytes=int(vmem_limit)),
    )


def simple_attention_layer(x, prep, *, batch_tile=None):
    """x: (B, N, D) fp32.  prep: output of prepare_params()."""
    B, N, D = x.shape
    Dp = prep["w01"].shape[-1]
    # Conservative weight footprint (assume 2 buffers in case single-buffering
    # is not honored on this JAX/libtpu version).
    weight_bytes = 2 * (prep["w01"].size * 2 + prep["w2"].size * 2
                        + prep["vec"].size * 4 + prep["b2"].size * 4)
    auto_bt, vmem_limit = _choose_batch_tile_and_vmem(B, N, D, Dp, weight_bytes)
    if batch_tile is None:
        batch_tile = auto_bt
    args = (x, prep["w01"], prep["w2"], prep["vec"], prep["b2"])
    # NOTE: when B % batch_tile != 0 the last tile carries garbage rows; every
    # per-row computation here is independent and out-of-range writes are masked,
    # so results stay correct (keep this per-row independence if restructuring).
    try:
        return _build_call(B, N, D, Dp, batch_tile, vmem_limit, True)(*args)
    except Exception:
        # pipeline_mode=pl.Buffered(1) unsupported here -> default double buffering.
        return _build_call(B, N, D, Dp, batch_tile, vmem_limit, False)(*args)


def init_params(key, D):
    """Deterministic synthetic parameters (PyTorch-style shapes, pre-transposed)."""
    ks = jax.random.split(key, 8)
    scale = 1.0 / jnp.sqrt(D)
    # nn.Linear stores (out, in); we transpose to (in, out) for the kernel.
    wp_pt = jax.random.uniform(ks[0], (D, D), jnp.float32, -scale, scale)
    w1_pt = jax.random.uniform(ks[1], (D, D), jnp.float32, -scale, scale)
    w2_pt = jax.random.uniform(ks[2], (D, D), jnp.float32, -scale, scale)
    return {
        "wp": wp_pt.T,
        "bp": jax.random.uniform(ks[3], (1, D), jnp.float32, -scale, scale),
        "aw": jax.random.uniform(ks[4], (D, 1), jnp.float32, -scale, scale),
        "w1": w1_pt.T,
        "b1": jax.random.uniform(ks[5], (1, D), jnp.float32, -scale, scale),
        # BatchNorm1d default init (eval mode / running stats)
        "gamma": jnp.ones((1, D), jnp.float32),
        "beta": jnp.zeros((1, D), jnp.float32),
        "rm": jnp.zeros((1, D), jnp.float32),
        "rv": jnp.ones((1, D), jnp.float32),
        "w2": w2_pt.T,
        "b2": jax.random.uniform(ks[6], (1, D), jnp.float32, -scale, scale),
    }


def reference(x, p):
    """Pure-JAX fp32 reference of the forward pass (eval mode, unfolded params)."""
    h = jnp.maximum(jnp.einsum("bnd,de->bne", x, p["wp"]) + p["bp"][0], 0.0)
    s = jnp.einsum("bne,eo->bno", h, p["aw"])[..., 0]
    a = jax.nn.softmax(s, axis=1)
    pooled = jnp.einsum("bnd,bn->bd", x, a)
    y = pooled @ p["w1"] + p["b1"][0]
    y = (y - p["rm"][0]) / jnp.sqrt(p["rv"][0] + 1e-12) * p["gamma"][0] + p["beta"][0]
    y = jnp.maximum(y, 0.0)
    return y @ p["w2"] + p["b2"][0]


if __name__ == "__main__":
    B, N, D = 2, 8, 32
    key = jax.random.PRNGKey(0)
    kx, kp = jax.random.split(key)
    x = jax.random.normal(kx, (B, N, D), jnp.float32)
    params = init_params(kp, D)
    prep = prepare_params(params)

    out = simple_attention_layer(x, prep)
    out = jax.block_until_ready(out)

    ref = reference(x, params)
    assert out.shape == (B, D)
    # bf16 MXU inputs with fp32 accumulation -> loosened tolerance vs fp32 reference.
    assert jnp.allclose(out, ref, atol=5e-2, rtol=5e-2), "mismatch vs reference"
    print("KERNEL_OK")
</pallas_src>

<mosaic_0001>
module attributes {stable_mosaic.version = 11 : i64} {
  func.func @simple_attention_kernel(%arg0: i32, %arg1: memref<2x8x32xf32, #tpu.memory_space<vmem>>, %arg2: memref<2x32x128xbf16, #tpu.memory_space<vmem>>, %arg3: memref<128x32xbf16, #tpu.memory_space<vmem>>, %arg4: memref<3x128xf32, #tpu.memory_space<vmem>>, %arg5: memref<1x32xf32, #tpu.memory_space<vmem>>, %arg6: memref<2x32xf32, #tpu.memory_space<vmem>>) attributes {dimension_semantics = [#tpu.dimension_semantics<parallel>], iteration_bounds = array<i64: 1>, scalar_prefetch = 0 : i64, scratch_operands = 0 : i64, tpu.core_type = #tpu.core_type<tc>, window_params = [{transform_indices = @transform_0, window_bounds = array<i64: 2, 8, 32>}, {pipeline_mode = #tpu.pipeline_mode<synchronous>, transform_indices = @transform_1, window_bounds = array<i64: 2, 32, 128>}, {pipeline_mode = #tpu.pipeline_mode<synchronous>, transform_indices = @transform_2, window_bounds = array<i64: 128, 32>}, {pipeline_mode = #tpu.pipeline_mode<synchronous>, transform_indices = @transform_3, window_bounds = array<i64: 3, 128>}, {pipeline_mode = #tpu.pipeline_mode<synchronous>, transform_indices = @transform_4, window_bounds = array<i64: 1, 32>}, {transform_indices = @transform_5, window_bounds = array<i64: 2, 32>}]} {
    %c0 = arith.constant 0 : index
    %c0_0 = arith.constant 0 : index
    %c0_1 = arith.constant 0 : index
    %0 = vector.load %arg1[%c0, %c0_0, %c0_1] : memref<2x8x32xf32, #tpu.memory_space<vmem>>, vector<2x8x32xf32>
    %1 = arith.truncf %0 : vector<2x8x32xf32> to vector<2x8x32xbf16>
    %c0_2 = arith.constant 0 : index
    %c0_3 = arith.constant 0 : index
    %c0_4 = arith.constant 0 : index
    %2 = vector.load %arg2[%c0_2, %c0_3, %c0_4] : memref<2x32x128xbf16, #tpu.memory_space<vmem>>, vector<1x32x128xbf16>
    %3 = vector.shape_cast %2 : vector<1x32x128xbf16> to vector<32x128xbf16>
    %c1 = arith.constant 1 : index
    %c0_5 = arith.constant 0 : index
    %c0_6 = arith.constant 0 : index
    %4 = vector.load %arg2[%c1, %c0_5, %c0_6] : memref<2x32x128xbf16, #tpu.memory_space<vmem>>, vector<1x32x128xbf16>
    %5 = vector.shape_cast %4 : vector<1x32x128xbf16> to vector<32x128xbf16>
    %c0_7 = arith.constant 0 : index
    %c0_8 = arith.constant 0 : index
    %6 = vector.load %arg4[%c0_7, %c0_8] : memref<3x128xf32, #tpu.memory_space<vmem>>, vector<1x128xf32>
    %c1_9 = arith.constant 1 : index
    %c0_10 = arith.constant 0 : index
    %7 = vector.load %arg4[%c1_9, %c0_10] : memref<3x128xf32, #tpu.memory_space<vmem>>, vector<1x128xf32>
    %c2 = arith.constant 2 : index
    %c0_11 = arith.constant 0 : index
    %8 = vector.load %arg4[%c2, %c0_11] : memref<3x128xf32, #tpu.memory_space<vmem>>, vector<1x128xf32>
    %9 = vector.shape_cast %1 : vector<2x8x32xbf16> to vector<16x32xbf16>
    %cst = arith.constant dense<0.000000e+00> : vector<16x128xf32>
    %10 = tpu.matmul %9, %3, %cst {dimension_numbers = #tpu.dot_dimension_numbers<[1], [0], [0], [1], [0, 0, 1, 1], [], []>} : vector<16x32xbf16>, vector<32x128xbf16>, vector<16x128xf32> -> vector<16x128xf32>
    %11 = vector.broadcast %6 : vector<1x128xf32> to vector<16x128xf32>
    %12 = arith.addf %10, %11 : vector<16x128xf32>
    %cst_12 = arith.constant 0.000000e+00 : f32
    %13 = vector.broadcast %cst_12 : f32 to vector<16x128xf32>
    %14 = arith.maximumf %12, %13 : vector<16x128xf32>
    %15 = vector.shape_cast %14 : vector<16x128xf32> to vector<2x8x128xf32>
    %16 = vector.shape_cast %7 : vector<1x128xf32> to vector<1x1x128xf32>
    %17 = vector.broadcast %16 : vector<1x1x128xf32> to vector<2x8x128xf32>
    %18 = arith.mulf %15, %17 : vector<2x8x128xf32>
    %cst_13 = arith.constant dense<0.000000e+00> : vector<2x8xf32>
    %19 = vector.multi_reduction <add>, %18, %cst_13 [2] : vector<2x8x128xf32> to vector<2x8xf32>
    %cst_14 = arith.constant dense<0xFF800000> : vector<2xf32>
    %20 = vector.multi_reduction <maximumf>, %19, %cst_14 [1] : vector<2x8xf32> to vector<2xf32>
    %21 = vector.shape_cast %20 : vector<2xf32> to vector<2x1xf32>
    %22 = vector.broadcast %21 : vector<2x1xf32> to vector<2x8xf32>
    %23 = arith.subf %19, %22 : vector<2x8xf32>
    %24 = math.exp %23 : vector<2x8xf32>
    %cst_15 = arith.constant dense<0.000000e+00> : vector<2xf32>
    %25 = vector.multi_reduction <add>, %24, %cst_15 [1] : vector<2x8xf32> to vector<2xf32>
    %26 = vector.shape_cast %25 : vector<2xf32> to vector<2x1xf32>
    %27 = vector.broadcast %26 : vector<2x1xf32> to vector<2x8xf32>
    %28 = arith.divf %24, %27 : vector<2x8xf32>
    %29 = vector.shape_cast %28 : vector<2x8xf32> to vector<2x8x1xf32>
    %30 = vector.broadcast %29 : vector<2x8x1xf32> to vector<2x8x32xf32>
    %31 = arith.mulf %30, %0 : vector<2x8x32xf32>
    %cst_16 = arith.constant dense<0.000000e+00> : vector<2x32xf32>
    %32 = vector.multi_reduction <add>, %31, %cst_16 [1] : vector<2x8x32xf32> to vector<2x32xf32>
    %33 = arith.truncf %32 : vector<2x32xf32> to vector<2x32xbf16>
    %cst_17 = arith.constant dense<0.000000e+00> : vector<2x128xf32>
    %34 = tpu.matmul %33, %5, %cst_17 {dimension_numbers = #tpu.dot_dimension_numbers<[1], [0], [0], [1], [0, 0, 1, 1], [], []>} : vector<2x32xbf16>, vector<32x128xbf16>, vector<2x128xf32> -> vector<2x128xf32>
    %35 = vector.broadcast %8 : vector<1x128xf32> to vector<2x128xf32>
    %36 = arith.addf %34, %35 : vector<2x128xf32>
    %cst_18 = arith.constant 0.000000e+00 : f32
    %37 = vector.broadcast %cst_18 : f32 to vector<2x128xf32>
    %38 = arith.maximumf %36, %37 : vector<2x128xf32>
    %39 = arith.truncf %38 : vector<2x128xf32> to vector<2x128xbf16>
    %c0_19 = arith.constant 0 : index
    %c0_20 = arith.constant 0 : index
    %40 = vector.load %arg3[%c0_19, %c0_20] : memref<128x32xbf16, #tpu.memory_space<vmem>>, vector<128x32xbf16>
    %cst_21 = arith.constant dense<0.000000e+00> : vector<2x32xf32>
    %41 = tpu.matmul %39, %40, %cst_21 {dimension_numbers = #tpu.dot_dimension_numbers<[1], [0], [0], [1], [0, 0, 1, 1], [], []>} : vector<2x128xbf16>, vector<128x32xbf16>, vector<2x32xf32> -> vector<2x32xf32>
    %c0_22 = arith.constant 0 : index
    %c0_23 = arith.constant 0 : index
    %42 = vector.load %arg5[%c0_22, %c0_23] : memref<1x32xf32, #tpu.memory_space<vmem>>, vector<1x32xf32>
    %43 = vector.broadcast %42 : vector<1x32xf32> to vector<2x32xf32>
    %44 = arith.addf %41, %43 : vector<2x32xf32>
    %c0_24 = arith.constant 0 : index
    %c0_25 = arith.constant 0 : index
    %45 = vector.load %arg6[%c0_24, %c0_25] : memref<2x32xf32, #tpu.memory_space<vmem>>, vector<2x32xf32>
    tpu.vector_store %arg6[%c0_24, %c0_25], %44 {strides = array<i32>} : memref<2x32xf32, #tpu.memory_space<vmem>>, vector<2x32xf32>,
    return
  }
  func.func @transform_0(%arg0: i32) -> (i32, i32, i32) {
    %c0_i32 = arith.constant 0 : i32
    %c0_i32_0 = arith.constant 0 : i32
    %c0_i32_1 = arith.constant 0 : i32
    return %arg0, %c0_i32, %c0_i32_0 : i32, i32, i32
  }
  func.func @transform_1(%arg0: i32) -> (i32, i32, i32) {
    %c0_i32 = arith.constant 0 : i32
    %c0_i32_0 = arith.constant 0 : i32
    %c0_i32_1 = arith.constant 0 : i32
    %c0_i32_2 = arith.constant 0 : i32
    return %c0_i32, %c0_i32_0, %c0_i32_1 : i32, i32, i32
  }
  func.func @transform_2(%arg0: i32) -> (i32, i32) {
    %c0_i32 = arith.constant 0 : i32
    %c0_i32_0 = arith.constant 0 : i32
    %c0_i32_1 = arith.constant 0 : i32
    return %c0_i32, %c0_i32_0 : i32, i32
  }
  func.func @transform_3(%arg0: i32) -> (i32, i32) {
    %c0_i32 = arith.constant 0 : i32
    %c0_i32_0 = arith.constant 0 : i32
    %c0_i32_1 = arith.constant 0 : i32
    return %c0_i32, %c0_i32_0 : i32, i32
  }
  func.func @transform_4(%arg0: i32) -> (i32, i32) {
    %c0_i32 = arith.constant 0 : i32
    %c0_i32_0 = arith.constant 0 : i32
    %c0_i32_1 = arith.constant 0 : i32
    return %c0_i32, %c0_i32_0 : i32, i32
  }
  func.func @transform_5(%arg0: i32) -> (i32, i32) {
    %c0_i32 = arith.constant 0 : i32
    %c0_i32_0 = arith.constant 0 : i32
    return %arg0, %c0_i32 : i32, i32
  }
}

module attributes {stable_mosaic.version = 11 : i64} {
  func.func @simple_attention_kernel(%arg0: i32, %arg1: memref<2x8x32xf32, #tpu.memory_space<vmem>>, %arg2: memref<2x32x128xbf16, #tpu.memory_space<vmem>>, %arg3: memref<128x32xbf16, #tpu.memory_space<vmem>>, %arg4: memref<3x128xf32, #tpu.memory_space<vmem>>, %arg5: memref<1x32xf32, #tpu.memory_space<vmem>>, %arg6: memref<2x32xf32, #tpu.memory_space<vmem>>) attributes {dimension_semantics = [#tpu.dimension_semantics<parallel>], iteration_bounds = array<i64: 1>, scalar_prefetch = 0 : i64, scratch_operands = 0 : i64, tpu.core_type = #tpu.core_type<tc>, window_params = [{transform_indices = @transform_0, window_bounds = array<i64: 2, 8, 32>}, {pipeline_mode = #tpu.pipeline_mode<synchronous>, transform_indices = @transform_1, window_bounds = array<i64: 2, 32, 128>}, {pipeline_mode = #tpu.pipeline_mode<synchronous>, transform_indices = @transform_2, window_bounds = array<i64: 128, 32>}, {pipeline_mode = #tpu.pipeline_mode<synchronous>, transform_indices = @transform_3, window_bounds = array<i64: 3, 128>}, {pipeline_mode = #tpu.pipeline_mode<synchronous>, transform_indices = @transform_4, window_bounds = array<i64: 1, 32>}, {transform_indices = @transform_5, window_bounds = array<i64: 2, 32>}]} {
    %c0 = arith.constant 0 : index
    %c0_0 = arith.constant 0 : index
    %c0_1 = arith.constant 0 : index
    %0 = vector.load %arg1[%c0, %c0_0, %c0_1] : memref<2x8x32xf32, #tpu.memory_space<vmem>>, vector<2x8x32xf32>
    %1 = arith.truncf %0 : vector<2x8x32xf32> to vector<2x8x32xbf16>
    %c0_2 = arith.constant 0 : index
    %c0_3 = arith.constant 0 : index
    %c0_4 = arith.constant 0 : index
    %2 = vector.load %arg2[%c0_2, %c0_3, %c0_4] : memref<2x32x128xbf16, #tpu.memory_space<vmem>>, vector<1x32x128xbf16>
    %3 = vector.shape_cast %2 : vector<1x32x128xbf16> to vector<32x128xbf16>
    %c1 = arith.constant 1 : index
    %c0_5 = arith.constant 0 : index
    %c0_6 = arith.constant 0 : index
    %4 = vector.load %arg2[%c1, %c0_5, %c0_6] : memref<2x32x128xbf16, #tpu.memory_space<vmem>>, vector<1x32x128xbf16>
    %5 = vector.shape_cast %4 : vector<1x32x128xbf16> to vector<32x128xbf16>
    %c0_7 = arith.constant 0 : index
    %c0_8 = arith.constant 0 : index
    %6 = vector.load %arg4[%c0_7, %c0_8] : memref<3x128xf32, #tpu.memory_space<vmem>>, vector<1x128xf32>
    %c1_9 = arith.constant 1 : index
    %c0_10 = arith.constant 0 : index
    %7 = vector.load %arg4[%c1_9, %c0_10] : memref<3x128xf32, #tpu.memory_space<vmem>>, vector<1x128xf32>
    %c2 = arith.constant 2 : index
    %c0_11 = arith.constant 0 : index
    %8 = vector.load %arg4[%c2, %c0_11] : memref<3x128xf32, #tpu.memory_space<vmem>>, vector<1x128xf32>
    %9 = vector.shape_cast %1 : vector<2x8x32xbf16> to vector<16x32xbf16>
    %cst = arith.constant dense<0.000000e+00> : vector<16x128xf32>
    %10 = tpu.matmul %9, %3, %cst {dimension_numbers = #tpu.dot_dimension_numbers<[1], [0], [0], [1], [0, 0, 1, 1], [], []>} : vector<16x32xbf16>, vector<32x128xbf16>, vector<16x128xf32> -> vector<16x128xf32>
    %11 = vector.broadcast %6 : vector<1x128xf32> to vector<16x128xf32>
    %12 = arith.addf %10, %11 : vector<16x128xf32>
    %cst_12 = arith.constant 0.000000e+00 : f32
    %13 = vector.broadcast %cst_12 : f32 to vector<16x128xf32>
    %14 = arith.maximumf %12, %13 : vector<16x128xf32>
    %15 = vector.shape_cast %14 : vector<16x128xf32> to vector<2x8x128xf32>
    %16 = vector.shape_cast %7 : vector<1x128xf32> to vector<1x1x128xf32>
    %17 = vector.broadcast %16 : vector<1x1x128xf32> to vector<2x8x128xf32>
    %18 = arith.mulf %15, %17 : vector<2x8x128xf32>
    %cst_13 = arith.constant dense<0.000000e+00> : vector<2x8xf32>
    %19 = vector.multi_reduction <add>, %18, %cst_13 [2] : vector<2x8x128xf32> to vector<2x8xf32>
    %cst_14 = arith.constant dense<0xFF800000> : vector<2xf32>
    %20 = vector.multi_reduction <maximumf>, %19, %cst_14 [1] : vector<2x8xf32> to vector<2xf32>
    %21 = vector.shape_cast %20 : vector<2xf32> to vector<2x1xf32>
    %22 = vector.broadcast %21 : vector<2x1xf32> to vector<2x8xf32>
    %23 = arith.subf %19, %22 : vector<2x8xf32>
    %24 = math.exp %23 : vector<2x8xf32>
    %cst_15 = arith.constant dense<0.000000e+00> : vector<2xf32>
    %25 = vector.multi_reduction <add>, %24, %cst_15 [1] : vector<2x8xf32> to vector<2xf32>
    %26 = vector.shape_cast %25 : vector<2xf32> to vector<2x1xf32>
    %27 = vector.broadcast %26 : vector<2x1xf32> to vector<2x8xf32>
    %28 = arith.divf %24, %27 : vector<2x8xf32>
    %29 = vector.shape_cast %28 : vector<2x8xf32> to vector<2x8x1xf32>
    %30 = vector.broadcast %29 : vector<2x8x1xf32> to vector<2x8x32xf32>
    %31 = arith.mulf %30, %0 : vector<2x8x32xf32>
    %cst_16 = arith.constant dense<0.000000e+00> : vector<2x32xf32>
    %32 = vector.multi_reduction <add>, %31, %cst_16 [1] : vector<2x8x32xf32> to vector<2x32xf32>
    %33 = arith.truncf %32 : vector<2x32xf32> to vector<2x32xbf16>
    %cst_17 = arith.constant dense<0.000000e+00> : vector<2x128xf32>
    %34 = tpu.matmul %33, %5, %cst_17 {dimension_numbers = #tpu.dot_dimension_numbers<[1], [0], [0], [1], [0, 0, 1, 1], [], []>} : vector<2x32xbf16>, vector<32x128xbf16>, vector<2x128xf32> -> vector<2x128xf32>
    %35 = vector.broadcast %8 : vector<1x128xf32> to vector<2x128xf32>
    %36 = arith.addf %34, %35 : vector<2x128xf32>
    %cst_18 = arith.constant 0.000000e+00 : f32
    %37 = vector.broadcast %cst_18 : f32 to vector<2x128xf32>
    %38 = arith.maximumf %36, %37 : vector<2x128xf32>
    %39 = arith.truncf %38 : vector<2x128xf32> to vector<2x128xbf16>
    %c0_19 = arith.constant 0 : index
    %c0_20 = arith.constant 0 : index
    %40 = vector.load %arg3[%c0_19, %c0_20] : memref<128x32xbf16, #tpu.memory_space<vmem>>, vector<128x32xbf16>
    %cst_21 = arith.constant dense<0.000000e+00> : vector<2x32xf32>
    %41 = tpu.matmul %39, %40, %cst_21 {dimension_numbers = #tpu.dot_dimension_numbers<[1], [0], [0], [1], [0, 0, 1, 1], [], []>} : vector<2x128xbf16>, vector<128x32xbf16>, vector<2x32xf32> -> vector<2x32xf32>
    %c0_22 = arith.constant 0 : index
    %c0_23 = arith.constant 0 : index
    %42 = vector.load %arg5[%c0_22, %c0_23] : memref<1x32xf32, #tpu.memory_space<vmem>>, vector<1x32xf32>
    %43 = vector.broadcast %42 : vector<1x32xf32> to vector<2x32xf32>
    %44 = arith.addf %41, %43 : vector<2x32xf32>
    %c0_24 = arith.constant 0 : index
    %c0_25 = arith.constant 0 : index
    %45 = vector.load %arg6[%c0_24, %c0_25] : memref<2x32xf32, #tpu.memory_space<vmem>>, vector<2x32xf32>
    tpu.vector_store %arg6[%c0_24, %c0_25], %44 {strides = array<i32>} : memref<2x32xf32, #tpu.memory_space<vmem>>, vector<2x32xf32>,
    return
  }
  func.func @transform_0(%arg0: i32) -> (i32, i32, i32) {
    %c0_i32 = arith.constant 0 : i32
    %c0_i32_0 = arith.constant 0 : i32
    %c0_i32_1 = arith.constant 0 : i32
    return %arg0, %c0_i32, %c0_i32_0 : i32, i32, i32
  }
  func.func @transform_1(%arg0: i32) -> (i32, i32, i32) {
    %c0_i32 = arith.constant 0 : i32
    %c0_i32_0 = arith.constant 0 : i32
    %c0_i32_1 = arith.constant 0 : i32
    %c0_i32_2 = arith.constant 0 : i32
    return %c0_i32, %c0_i32_0, %c0_i32_1 : i32, i32, i32
  }
  func.func @transform_2(%arg0: i32) -> (i32, i32) {
    %c0_i32 = arith.constant 0 : i32
    %c0_i32_0 = arith.constant 0 : i32
    %c0_i32_1 = arith.constant 0 : i32
    return %c0_i32, %c0_i32_0 : i32, i32
  }
  func.func @transform_3(%arg0: i32) -> (i32, i32) {
    %c0_i32 = arith.constant 0 : i32
    %c0_i32_0 = arith.constant 0 : i32
    %c0_i32_1 = arith.constant 0 : i32
    return %c0_i32, %c0_i32_0 : i32, i32
  }
  func.func @transform_4(%arg0: i32) -> (i32, i32) {
    %c0_i32 = arith.constant 0 : i32
    %c0_i32_0 = arith.constant 0 : i32
    %c0_i32_1 = arith.constant 0 : i32
    return %c0_i32, %c0_i32_0 : i32, i32
  }
  func.func @transform_5(%arg0: i32) -> (i32, i32) {
    %c0_i32 = arith.constant 0 : i32
    %c0_i32_0 = arith.constant 0 : i32
    return %arg0, %c0_i32 : i32, i32
  }
}

</mosaic_0001>

<llo_original>
// kernel: tpu_custom_call.1
$region0: #{tpu_custom_call.1}
  #allocation0 [shape = 'u32[]', space=smem, size = 0x4, offset = 0x4, fixed_abs, tag = 'smem constant byte address 0x4 - core index']
  #allocation1 [shape = 'u32[144,128]{1,0:T(1,128)}', space=vmem, size = 0x12000, scoped, tag = 'internal scratch']
  %s0 = inlined_call_operand.vmem [shape: f32[2,8,32], index: 0, kind: input, shape index: {}]
  %s1 = inlined_call_operand.vmem [shape: bf16[2,32,128], index: 1, kind: input, shape index: {}]
  %s2 = inlined_call_operand.vmem [shape: bf16[128,32], index: 2, kind: input, shape index: {}]
  %s3 = inlined_call_operand.vmem [shape: f32[3,128], index: 3, kind: input, shape index: {}]
  %s4 = inlined_call_operand.vmem [shape: f32[1,32], index: 4, kind: input, shape index: {}]
  %s5 = inlined_call_operand.hbm [shape: f32[2,32], index: 5, kind: output, shape index: {}]
  %s6 = sld [smem:[#allocation0]]
  $region30: #{tpu_custom_call.1} parent=0
    _
  %s8 = ssub.s32 1, %s6
  %s9 = scalar_select 0, %s8, %s6
  $region1: #{tpu_custom_call.1} parent=0
    #allocation2 [shape = 'u8[1024]{0}', space=vmem, size = 0x400, scoped, tag = 'output window, operand 0, single buffered']
    #allocation3 [shape = 's32[1]{0}', space=sflag, size = 0x4, scoped, tag = 'scoped memory for tpu_custom_call.1']
    %10 = vsyncpa [#allocation3], 0
    // Predicated region
    $region2: #{tpu_custom_call.1} parent=1 // pred_check
      _
    $region3: #{tpu_custom_call.1} parent=1 // pred_check_branch
      %12 = sbr.rel (0) target = $region5
    $region4: #{tpu_custom_call.1} parent=1 // pred_region
      _
    $region5: #{tpu_custom_call.1} parent=1 // pred_fallthru
      _
    // Predicated region
    $region6: #{tpu_custom_call.1} parent=1 // pred_check
      _
    $region7: #{tpu_custom_call.1} parent=1 // pred_check_branch
      %14 = sbr.rel (0) target = $region9
    $region8: #{tpu_custom_call.1} parent=1 // pred_region
      _
    $region9: #{tpu_custom_call.1} parent=1 // pred_fallthru
      _
    // Predicated region
    $region10: #{tpu_custom_call.1} parent=1 // pred_check
      _
    $region11: #{tpu_custom_call.1} parent=1 // pred_check_branch
      %16 = sbr.rel (0) target = $region13
    $region12: #{tpu_custom_call.1} parent=1 // pred_region
      _
    $region13: #{tpu_custom_call.1} parent=1 // pred_fallthru
      _
    // Predicated region
    $region14: #{tpu_custom_call.1} parent=1 // pred_check
      _
    $region15: #{tpu_custom_call.1} parent=1 // pred_check_branch
      %18 = sbr.rel (0) target = $region17
    $region16: #{tpu_custom_call.1} parent=1 // pred_region
      _
    $region17: #{tpu_custom_call.1} parent=1 // pred_fallthru
      _
    // Predicated region
    $region18: #{tpu_custom_call.1} parent=1 // pred_check
      _
    $region19: #{tpu_custom_call.1} parent=1 // pred_check_branch
      %20 = sbr.rel (0) target = $region21
    $region20: #{tpu_custom_call.1} parent=1 // pred_region
      _
    $region21: #{tpu_custom_call.1} parent=1 // pred_fallthru
      _
    %v22 = vld [vmem:[%s0] sm:$0xff]
    %v23 = vld [vmem:[%s0 + $0x8] sm:$0xff]
    %v24 = vpack.c.bf16 %v22, %v22
    %v25 = vpack.c.bf16 %v23, %v23
    %v26 = vld [vmem:[%s1] sm:$0xf]
    %v27 = vld [vmem:[%s1 + $0x4] sm:$0xf]
    %v28 = vld [vmem:[%s1 + $0x8] sm:$0xf]
    %v29 = vld [vmem:[%s1 + $0xc] sm:$0xf]
    %s30 = scalar_lea.vmem %s1, 16
    %v31 = vld [vmem:[%s30] sm:$0xf]
    %v32 = vld [vmem:[%s30 + $0x4] sm:$0xf]
    %v33 = vld [vmem:[%s30 + $0x8] sm:$0xf]
    %v34 = vld [vmem:[%s30 + $0xc] sm:$0xf]
    %v35 = vld [vmem:[%s3] sm:$0x1]
    %v36 = vld [vmem:[%s3 + $0x1] sm:$0x1]
    %v37 = vld [vmem:[%s3 + $0x2] sm:$0x1]
    %v38 = vlaneseq
    %v39 = vshrl.u32 %v38, 7
    %v40 = vsub.s32 0, %v39
    %v41 = vrot.slane %v35, %v40
    %v44 = vunpack.c.l.b16 %v24
    %v45 = vunpack.c.l.b16 %v25
    %v46 = vpack.c.b16 %v45, %v44
    %v51 = vunpack.c.l.b16 %v26
    %v52 = vunpack.c.l.b16 %v27
    %v53 = vunpack.c.l.b16 %v28
    %v54 = vunpack.c.l.b16 %v29
    %v55 = vpack.c.b16 %v52, %v51
    %v56 = vpack.c.b16 %v54, %v53
    %vm59 = vcmask 261120
    %v61 = vsel %vm59, %v46, 0
    %63 = vmatprep.subr.bf16.mxu0 0
    %64 = vmatpush1.bf16.msra.mxu0 %v55
    %65 = vmatprep.subr.bf16.mxu0 0
    %66 = vmatpush1.bf16.msra.mxu0 %v56
    %67 = vmatprep.subr.bf16.mxu0 0
    %68 = vmatpush1.bf16.msra.mxu0 0
    %69 = vmatprep.subr.bf16.mxu0 0
    %70 = vmatpush1.bf16.msra.mxu0 0
    %71 = vmatprep.subr.bf16.mxu0 0
    %72 = vmatpush1.bf16.msra.mxu0 0
    %73 = vmatprep.subr.bf16.mxu0 0
    %74 = vmatpush1.bf16.msra.mxu0 0
    %75 = vmatprep.subr.bf16.mxu0 0
    %76 = vmatpush1.bf16.msra.mxu0 0
    %77 = vmatprep.subr.bf16.mxu0 0
    %78 = vmatpush1.bf16.msra.mxu0 0
    %79 = vmatprep.subr.bf16.mxu0 0
    %80 = vmatpush1.bf16.msra.mxu0 0
    %81 = vmatprep.subr.bf16.mxu0 0
    %82 = vmatpush1.bf16.msra.mxu0 0
    %83 = vmatprep.subr.bf16.mxu0 0
    %84 = vmatpush1.bf16.msra.mxu0 0
    %85 = vmatprep.subr.bf16.mxu0 0
    %86 = vmatpush1.bf16.msra.mxu0 0
    %87 = vmatprep.subr.bf16.mxu0 0
    %88 = vmatpush1.bf16.msra.mxu0 0
    %89 = vmatprep.subr.bf16.mxu0 0
    %90 = vmatpush1.bf16.msra.mxu0 0
    %91 = vmatprep.subr.bf16.mxu0 0
    %92 = vmatpush1.bf16.msra.mxu0 0
    %93 = vmatprep.subr.bf16.mxu0 0
    %94 = vmatpush1.bf16.msra.mxu0 0
    %95 = vmatprep.mubr.bf16.mxu0 0
    %96 = vmatmul.mubr.bf16.gmra.mrb[0].mxu0 %v61
    %v97 = vpop.f32.mrb[0].mxu0
    %v98 = vadd.f32 %v41, %v97
    %v99 = vpop.f32.mrb[0].mxu0
    %v100 = vpop.f32.mrb[0].mxu0
    %v101 = vadd.f32 %v41, %v100
    %v102 = vpop.f32.mrb[0].mxu0
    %103 = vdwg.mxu0
    %v104 = vmax.f32 %v98, 0.0
    %v105 = vmax.f32 %v101, 0.0
    %v106 = vlaneseq
    %v107 = vshrl.u32 %v106, 7
    %v108 = vsub.s32 0, %v107
    %v109 = vrot.slane %v36, %v108
    %v110 = vmul.f32 %v104, %v109
    %v111 = vmul.f32 %v105, %v109
    %112 = vadd.xlane.f32.xlu0 %v110
    %v113 = vpop.xlane.xlu0 %112
    %114 = vadd.xlane.f32.xlu0 %v111
    %v115 = vpop.xlane.xlu0 %114
    %v118 = vlaneseq
    %v119 = vand.u32 %v118, 127
    %v120 = vlaneseq
    %v121 = vshrl.u32 %v120, 7
    %v122 = vsub.s32 %v119, %v121
    %v123 = vrot.slane %v113, %v122
    %v124 = vlaneseq
    %v125 = vshrl.u32 %v124, 7
    %v126 = vsub.s32 %v119, %v125
    %v127 = vrot.slane %v115, %v126
    %vm128 = vcmask 1041409
    %v129 = vsel %vm128, %v127, %v123
    %vm131 = vcmask 58368
    %v132 = vsel %vm131, %v129, -inf
    %133 = vmax.xlane.f32.xlu0 %v132
    %v134 = vpop.xlane.xlu0 %133
    %v136 = vlaneseq
    %v137 = vshrl.u32 %v136, 7
    %v138 = vsub.s32 0, %v137
    %v139 = vrot.slane %v134, %v138
    %v140 = vlaneseq
    %v141 = vshrl.u32 %v140, 7
    %v142 = vsub.s32 1, %v141
    %v143 = vrot.slane %v134, %v142
    %v146 = vsub.f32 %v113, %v139
    %v147 = vsub.f32 %v115, %v143
    %v148 = vmul.f32 %v146, 1.442695
    %v149 = vpow.pop %v148
    %v150 = vmul.f32 %v147, 1.442695
    %v151 = vpow.pop %v150
    %154 = vset.pattern.permute.xlu0 0
    %155 = vperm.xlu0 %154, %v149
    %v156 = vpop.permute.xlu0 %155
    %157 = vset.pattern.permute.xlu0 0
    %158 = vperm.xlu0 %157, %v151
    %v159 = vpop.permute.xlu0 %158
    %v160 = vlaneseq
    %v161 = vshrl.u32 %v160, 7
    %v162 = vsub.s32 %v119, %v161
    %v163 = vrot.slane %v156, %v162
    %v164 = vlaneseq
    %v165 = vshrl.u32 %v164, 7
    %v166 = vsub.s32 %v119, %v165
    %v167 = vrot.slane %v159, %v166
    %v168 = vsel %vm128, %v167, %v163
    %v170 = vsel %vm131, %v168, 0.0
    %171 = vadd.xlane.f32.xlu0 %v170
    %v172 = vpop.xlane.xlu0 %171
    %v174 = vlaneseq
    %v175 = vshrl.u32 %v174, 7
    %v176 = vsub.s32 0, %v175
    %v177 = vrot.slane %v172, %v176
    %v178 = vlaneseq
    %v179 = vshrl.u32 %v178, 7
    %v180 = vsub.s32 1, %v179
    %v181 = vrot.slane %v172, %v180
    %v184 = vrcp.pop %v177
    %v185 = vmul.f32 %v149, %v184
    %v186 = vrcp.pop %v181
    %v187 = vmul.f32 %v151, %v186
    %189 = vset.pattern.permute.xlu0 0
    %190 = vperm.xlu0 %189, %v185
    %v191 = vpop.permute.xlu0 %190
    %194 = vset.pattern.permute.xlu0 0
    %195 = vperm.xlu0 %194, %v187
    %v196 = vpop.permute.xlu0 %195
    %v198 = vmul.f32 %v191, %v22
    %v199 = vmul.f32 %v196, %v23
    %v200 = vsel %vm59, %v198, 0.0
    %v201 = vrot.slane %v200, 4
    %v202 = vadd.f32 %v200, %v201
    %v203 = vrot.slane %v202, 2
    %v204 = vadd.f32 %v202, %v203
    %v205 = vrot.slane %v204, 1
    %v206 = vadd.f32 %v204, %v205
    %v207 = vsel %vm59, %v199, 0.0
    %v208 = vrot.slane %v207, 4
    %v209 = vadd.f32 %v207, %v208
    %v210 = vrot.slane %v209, 2
    %v211 = vadd.f32 %v209, %v210
    %v212 = vrot.slane %v211, 1
    %v213 = vadd.f32 %v211, %v212
    %v214 = vpack.c.bf16 %v206, %v206
    %v215 = vpack.c.bf16 %v213, %v213
    %v216 = vlaneseq
    %v217 = vshrl.u32 %v216, 7
    %v218 = vsub.s32 0, %v217
    %v219 = vrot.slane %v37, %v218
    %v222 = vunpack.c.l.b16 %v214
    %v223 = vunpack.c.l.b16 %v215
    %v224 = vsel %vm128, %v223, %v222
    %v225 = vpack.c.b16 %v224, %v224
    %v230 = vunpack.c.l.b16 %v31
    %v231 = vunpack.c.l.b16 %v32
    %v232 = vunpack.c.l.b16 %v33
    %v233 = vunpack.c.l.b16 %v34
    %v234 = vpack.c.b16 %v231, %v230
    %v235 = vpack.c.b16 %v233, %v232
    %v239 = vsel %vm59, %v225, 0
    %241 = vmatprep.subr.bf16.mxu0 0
    %242 = vmatpush1.bf16.msra.mxu0 %v234
    %243 = vmatprep.subr.bf16.mxu0 0
    %244 = vmatpush1.bf16.msra.mxu0 %v235
    %245 = vmatprep.subr.bf16.mxu0 0
    %246 = vmatpush1.bf16.msra.mxu0 0
    %247 = vmatprep.subr.bf16.mxu0 0
    %248 = vmatpush1.bf16.msra.mxu0 0
    %249 = vmatprep.subr.bf16.mxu0 0
    %250 = vmatpush1.bf16.msra.mxu0 0
    %251 = vmatprep.subr.bf16.mxu0 0
    %252 = vmatpush1.bf16.msra.mxu0 0
    %253 = vmatprep.subr.bf16.mxu0 0
    %254 = vmatpush1.bf16.msra.mxu0 0
    %255 = vmatprep.subr.bf16.mxu0 0
    %256 = vmatpush1.bf16.msra.mxu0 0
    %257 = vmatprep.subr.bf16.mxu0 0
    %258 = vmatpush1.bf16.msra.mxu0 0
    %259 = vmatprep.subr.bf16.mxu0 0
    %260 = vmatpush1.bf16.msra.mxu0 0
    %261 = vmatprep.subr.bf16.mxu0 0
    %262 = vmatpush1.bf16.msra.mxu0 0
    %263 = vmatprep.subr.bf16.mxu0 0
    %264 = vmatpush1.bf16.msra.mxu0 0
    %265 = vmatprep.subr.bf16.mxu0 0
    %266 = vmatpush1.bf16.msra.mxu0 0
    %267 = vmatprep.subr.bf16.mxu0 0
    %268 = vmatpush1.bf16.msra.mxu0 0
    %269 = vmatprep.subr.bf16.mxu0 0
    %270 = vmatpush1.bf16.msra.mxu0 0
    %271 = vmatprep.subr.bf16.mxu0 0
    %272 = vmatpush1.bf16.msra.mxu0 0
    %273 = vmatprep.mubr.bf16.mxu0 0
    %274 = vmatmul.mubr.bf16.gmra.mrb[0].mxu0 %v239
    %v275 = vpop.f32.mrb[0].mxu0
    %v276 = vadd.f32 %v219, %v275
    %v277 = vpop.f32.mrb[0].mxu0
    %v278 = vpop.f32.mrb[0].mxu0
    %v279 = vpop.f32.mrb[0].mxu0
    %280 = vdwg.mxu0
    %v281 = vmax.f32 %v276, 0.0
    %v282 = vpack.c.bf16 %v281, %v281
    %v283 = vld [vmem:[%s2] sm:$0xf]
    %v284 = vld [vmem:[%s2 + $0x4] sm:$0xf]
    %v285 = vld [vmem:[%s2 + $0x8] sm:$0xf]
    %v286 = vld [vmem:[%s2 + $0xc] sm:$0xf]
    %v287 = vld [vmem:[%s2 + $0x10] sm:$0xf]
    %v288 = vld [vmem:[%s2 + $0x14] sm:$0xf]
    %v289 = vld [vmem:[%s2 + $0x18] sm:$0xf]
    %v290 = vld [vmem:[%s2 + $0x1c] sm:$0xf]
    %v291 = vld [vmem:[%s2 + $0x20] sm:$0xf]
    %v292 = vld [vmem:[%s2 + $0x24] sm:$0xf]
    %v293 = vld [vmem:[%s2 + $0x28] sm:$0xf]
    %v294 = vld [vmem:[%s2 + $0x2c] sm:$0xf]
    %v295 = vld [vmem:[%s2 + $0x30] sm:$0xf]
    %v296 = vld [vmem:[%s2 + $0x34] sm:$0xf]
    %v297 = vld [vmem:[%s2 + $0x38] sm:$0xf]
    %v298 = vld [vmem:[%s2 + $0x3c] sm:$0xf]
    %v299 = vld [vmem:[%s4] sm:$0x1]
    %v301 = vlaneseq
    %v302 = vshrl.u32 %v301, 7
    %v303 = vsub.s32 0, %v302
    %v304 = vrot.slane %v299, %v303
    %v322 = vunpack.c.l.b16 %v283
    %v323 = vunpack.c.l.b16 %v284
    %v324 = vunpack.c.l.b16 %v285
    %v325 = vunpack.c.l.b16 %v286
    %v326 = vunpack.c.l.b16 %v287
    %v327 = vunpack.c.l.b16 %v288
    %v328 = vunpack.c.l.b16 %v289
    %v329 = vunpack.c.l.b16 %v290
    %v330 = vunpack.c.l.b16 %v291
    %v331 = vunpack.c.l.b16 %v292
    %v332 = vunpack.c.l.b16 %v293
    %v333 = vunpack.c.l.b16 %v294
    %v334 = vunpack.c.l.b16 %v295
    %v335 = vunpack.c.l.b16 %v296
    %v336 = vunpack.c.l.b16 %v297
    %v337 = vunpack.c.l.b16 %v298
    %v338 = vpack.c.b16 %v323, %v322
    %v339 = vpack.c.b16 %v325, %v324
    %v340 = vpack.c.b16 %v327, %v326
    %v341 = vpack.c.b16 %v329, %v328
    %v342 = vpack.c.b16 %v331, %v330
    %v343 = vpack.c.b16 %v333, %v332
    %v344 = vpack.c.b16 %v335, %v334
    %v345 = vpack.c.b16 %v337, %v336
    %354 = vmatprep.subr.bf16.mxu0 0
    %355 = vmatpush1.bf16.msra.mxu0 %v338
    %356 = vmatprep.subr.bf16.mxu0 0
    %357 = vmatpush1.bf16.msra.mxu0 %v339
    %358 = vmatprep.subr.bf16.mxu0 0
    %359 = vmatpush1.bf16.msra.mxu0 %v340
    %360 = vmatprep.subr.bf16.mxu0 0
    %361 = vmatpush1.bf16.msra.mxu0 %v341
    %362 = vmatprep.subr.bf16.mxu0 0
    %363 = vmatpush1.bf16.msra.mxu0 %v342
    %364 = vmatprep.subr.bf16.mxu0 0
    %365 = vmatpush1.bf16.msra.mxu0 %v343
    %366 = vmatprep.subr.bf16.mxu0 0
    %367 = vmatpush1.bf16.msra.mxu0 %v344
    %368 = vmatprep.subr.bf16.mxu0 0
    %369 = vmatpush1.bf16.msra.mxu0 %v345
    %370 = vmatprep.subr.bf16.mxu0 0
    %371 = vmatpush1.bf16.msra.mxu0 0
    %372 = vmatprep.subr.bf16.mxu0 0
    %373 = vmatpush1.bf16.msra.mxu0 0
    %374 = vmatprep.subr.bf16.mxu0 0
    %375 = vmatpush1.bf16.msra.mxu0 0
    %376 = vmatprep.subr.bf16.mxu0 0
    %377 = vmatpush1.bf16.msra.mxu0 0
    %378 = vmatprep.subr.bf16.mxu0 0
    %379 = vmatpush1.bf16.msra.mxu0 0
    %380 = vmatprep.subr.bf16.mxu0 0
    %381 = vmatpush1.bf16.msra.mxu0 0
    %382 = vmatprep.subr.bf16.mxu0 0
    %383 = vmatpush1.bf16.msra.mxu0 0
    %384 = vmatprep.subr.bf16.mxu0 0
    %385 = vmatpush1.bf16.msra.mxu0 0
    %386 = vmatprep.mubr.bf16.mxu0 0
    %387 = vmatmul.mubr.bf16.gmra.mrb[0].mxu0 %v282
    %v388 = vpop.f32.mrb[0].mxu0
    %v389 = vadd.f32 %v304, %v388
    %v390 = vpop.f32.mrb[0].mxu0
    %v391 = vpop.f32.mrb[0].mxu0
    %v392 = vpop.f32.mrb[0].mxu0
    %393 = vdwg.mxu0
    %vm394 = vcmask 254976
    %395 = vst.msk [vmem:[#allocation2] sm:$0x3] %vm394, %v389
    // Predicated region
    $region22: #{tpu_custom_call.1} parent=1 // pred_check
      _
    $region23: #{tpu_custom_call.1} parent=1 // pred_check_branch
      %397 = sbr.rel (0) target = $region25
    $region24: #{tpu_custom_call.1} parent=1 // pred_region
      %s399 = ssub.s32 32, 32
      %400 = vsyncadd [#allocation3], %s399
      %s402 = sshll.u32 [#allocation2], 4
      %s403 = int_to_ptr.vmem [resolvable:$true] %s402
      %405 = dma.vmem_to_hbm [thread:$0]  %s403, 32, %s5, [#allocation3]
    $region25: #{tpu_custom_call.1} parent=1 // pred_fallthru
      _
    // Predicated region
    $region26: #{tpu_custom_call.1} parent=1 // pred_check
      _
    $region27: #{tpu_custom_call.1} parent=1 // pred_check_branch
      %407 = sbr.rel (0) target = $region29
    $region28: #{tpu_custom_call.1} parent=1 // pred_region
      %408 = dma.done [#allocation3], 32
    $region29: #{tpu_custom_call.1} parent=1 // pred_fallthru
      _
    %409 = vsyncpa [#allocation3], 1

// kernel: tpu_custom_call.1
$region0: #{tpu_custom_call.1}
  #allocation0 [shape = 'u32[]', space=smem, size = 0x4, offset = 0x4, fixed_abs, tag = 'smem constant byte address 0x4 - core index']
  #allocation1 [shape = 'u32[144,128]{1,0:T(1,128)}', space=vmem, size = 0x12000, scoped, tag = 'internal scratch']
  %s0 = inlined_call_operand.vmem [shape: f32[2,8,32], index: 0, kind: input, shape index: {}]
  %s1 = inlined_call_operand.vmem [shape: bf16[2,32,128], index: 1, kind: input, shape index: {}]
  %s2 = inlined_call_operand.vmem [shape: bf16[128,32], index: 2, kind: input, shape index: {}]
  %s3 = inlined_call_operand.vmem [shape: f32[3,128], index: 3, kind: input, shape index: {}]
  %s4 = inlined_call_operand.vmem [shape: f32[1,32], index: 4, kind: input, shape index: {}]
  %s5 = inlined_call_operand.hbm [shape: f32[2,32], index: 5, kind: output, shape index: {}]
  %s6 = sld [smem:[#allocation0]]
  $region30: #{tpu_custom_call.1} parent=0
    _
  %s8 = ssub.s32 1, %s6
  %s9 = scalar_select 0, %s8, %s6
  $region1: #{tpu_custom_call.1} parent=0
    #allocation2 [shape = 'u8[1024]{0}', space=vmem, size = 0x400, scoped, tag = 'output window, operand 0, single buffered']
    #allocation3 [shape = 's32[1]{0}', space=sflag, size = 0x4, scoped, tag = 'scoped memory for tpu_custom_call.1']
    %10 = vsyncpa [#allocation3], 0
    // Predicated region
    $region2: #{tpu_custom_call.1} parent=1 // pred_check
      _
    $region3: #{tpu_custom_call.1} parent=1 // pred_check_branch
      %12 = sbr.rel (0) target = $region5
    $region4: #{tpu_custom_call.1} parent=1 // pred_region
      _
    $region5: #{tpu_custom_call.1} parent=1 // pred_fallthru
      _
    // Predicated region
    $region6: #{tpu_custom_call.1} parent=1 // pred_check
      _
    $region7: #{tpu_custom_call.1} parent=1 // pred_check_branch
      %14 = sbr.rel (0) target = $region9
    $region8: #{tpu_custom_call.1} parent=1 // pred_region
      _
    $region9: #{tpu_custom_call.1} parent=1 // pred_fallthru
      _
    // Predicated region
    $region10: #{tpu_custom_call.1} parent=1 // pred_check
      _
    $region11: #{tpu_custom_call.1} parent=1 // pred_check_branch
      %16 = sbr.rel (0) target = $region13
    $region12: #{tpu_custom_call.1} parent=1 // pred_region
      _
    $region13: #{tpu_custom_call.1} parent=1 // pred_fallthru
      _
    // Predicated region
    $region14: #{tpu_custom_call.1} parent=1 // pred_check
      _
    $region15: #{tpu_custom_call.1} parent=1 // pred_check_branch
      %18 = sbr.rel (0) target = $region17
    $region16: #{tpu_custom_call.1} parent=1 // pred_region
      _
    $region17: #{tpu_custom_call.1} parent=1 // pred_fallthru
      _
    // Predicated region
    $region18: #{tpu_custom_call.1} parent=1 // pred_check
      _
    $region19: #{tpu_custom_call.1} parent=1 // pred_check_branch
      %20 = sbr.rel (0) target = $region21
    $region20: #{tpu_custom_call.1} parent=1 // pred_region
      _
    $region21: #{tpu_custom_call.1} parent=1 // pred_fallthru
      _
    %v22 = vld [vmem:[%s0] sm:$0xff]
    %v23 = vld [vmem:[%s0 + $0x8] sm:$0xff]
    %v24 = vpack.c.bf16 %v22, %v22
    %v25 = vpack.c.bf16 %v23, %v23
    %v26 = vld [vmem:[%s1] sm:$0xf]
    %v27 = vld [vmem:[%s1 + $0x4] sm:$0xf]
    %v28 = vld [vmem:[%s1 + $0x8] sm:$0xf]
    %v29 = vld [vmem:[%s1 + $0xc] sm:$0xf]
    %s30 = scalar_lea.vmem %s1, 16
    %v31 = vld [vmem:[%s30] sm:$0xf]
    %v32 = vld [vmem:[%s30 + $0x4] sm:$0xf]
    %v33 = vld [vmem:[%s30 + $0x8] sm:$0xf]
    %v34 = vld [vmem:[%s30 + $0xc] sm:$0xf]
    %v35 = vld [vmem:[%s3] sm:$0x1]
    %v36 = vld [vmem:[%s3 + $0x1] sm:$0x1]
    %v37 = vld [vmem:[%s3 + $0x2] sm:$0x1]
    %v38 = vlaneseq
    %v39 = vshrl.u32 %v38, 7
    %v40 = vsub.s32 0, %v39
    %v41 = vrot.slane %v35, %v40
    %v44 = vunpack.c.l.b16 %v24
    %v45 = vunpack.c.l.b16 %v25
    %v46 = vpack.c.b16 %v45, %v44
    %v51 = vunpack.c.l.b16 %v26
    %v52 = vunpack.c.l.b16 %v27
    %v53 = vunpack.c.l.b16 %v28
    %v54 = vunpack.c.l.b16 %v29
    %v55 = vpack.c.b16 %v52, %v51
    %v56 = vpack.c.b16 %v54, %v53
    %vm59 = vcmask 261120
    %v61 = vsel %vm59, %v46, 0
    %63 = vmatprep.subr.bf16.mxu0 0
    %64 = vmatpush1.bf16.msra.mxu0 %v55
    %65 = vmatprep.subr.bf16.mxu0 0
    %66 = vmatpush1.bf16.msra.mxu0 %v56
    %67 = vmatprep.subr.bf16.mxu0 0
    %68 = vmatpush1.bf16.msra.mxu0 0
    %69 = vmatprep.subr.bf16.mxu0 0
    %70 = vmatpush1.bf16.msra.mxu0 0
    %71 = vmatprep.subr.bf16.mxu0 0
    %72 = vmatpush1.bf16.msra.mxu0 0
    %73 = vmatprep.subr.bf16.mxu0 0
    %74 = vmatpush1.bf16.msra.mxu0 0
    %75 = vmatprep.subr.bf16.mxu0 0
    %76 = vmatpush1.bf16.msra.mxu0 0
    %77 = vmatprep.subr.bf16.mxu0 0
    %78 = vmatpush1.bf16.msra.mxu0 0
    %79 = vmatprep.subr.bf16.mxu0 0
    %80 = vmatpush1.bf16.msra.mxu0 0
    %81 = vmatprep.subr.bf16.mxu0 0
    %82 = vmatpush1.bf16.msra.mxu0 0
    %83 = vmatprep.subr.bf16.mxu0 0
    %84 = vmatpush1.bf16.msra.mxu0 0
    %85 = vmatprep.subr.bf16.mxu0 0
    %86 = vmatpush1.bf16.msra.mxu0 0
    %87 = vmatprep.subr.bf16.mxu0 0
    %88 = vmatpush1.bf16.msra.mxu0 0
    %89 = vmatprep.subr.bf16.mxu0 0
    %90 = vmatpush1.bf16.msra.mxu0 0
    %91 = vmatprep.subr.bf16.mxu0 0
    %92 = vmatpush1.bf16.msra.mxu0 0
    %93 = vmatprep.subr.bf16.mxu0 0
    %94 = vmatpush1.bf16.msra.mxu0 0
    %95 = vmatprep.mubr.bf16.mxu0 0
    %96 = vmatmul.mubr.bf16.gmra.mrb[0].mxu0 %v61
    %v97 = vpop.f32.mrb[0].mxu0
    %v98 = vadd.f32 %v41, %v97
    %v99 = vpop.f32.mrb[0].mxu0
    %v100 = vpop.f32.mrb[0].mxu0
    %v101 = vadd.f32 %v41, %v100
    %v102 = vpop.f32.mrb[0].mxu0
    %103 = vdwg.mxu0
    %v104 = vmax.f32 %v98, 0.0
    %v105 = vmax.f32 %v101, 0.0
    %v106 = vlaneseq
    %v107 = vshrl.u32 %v106, 7
    %v108 = vsub.s32 0, %v107
    %v109 = vrot.slane %v36, %v108
    %v110 = vmul.f32 %v104, %v109
    %v111 = vmul.f32 %v105, %v109
    %112 = vadd.xlane.f32.xlu0 %v110
    %v113 = vpop.xlane.xlu0 %112
    %114 = vadd.xlane.f32.xlu0 %v111
    %v115 = vpop.xlane.xlu0 %114
    %v118 = vlaneseq
    %v119 = vand.u32 %v118, 127
    %v120 = vlaneseq
    %v121 = vshrl.u32 %v120, 7
    %v122 = vsub.s32 %v119, %v121
    %v123 = vrot.slane %v113, %v122
    %v124 = vlaneseq
    %v125 = vshrl.u32 %v124, 7
    %v126 = vsub.s32 %v119, %v125
    %v127 = vrot.slane %v115, %v126
    %vm128 = vcmask 1041409
    %v129 = vsel %vm128, %v127, %v123
    %vm131 = vcmask 58368
    %v132 = vsel %vm131, %v129, -inf
    %133 = vmax.xlane.f32.xlu0 %v132
    %v134 = vpop.xlane.xlu0 %133
    %v136 = vlaneseq
    %v137 = vshrl.u32 %v136, 7
    %v138 = vsub.s32 0, %v137
    %v139 = vrot.slane %v134, %v138
    %v140 = vlaneseq
    %v141 = vshrl.u32 %v140, 7
    %v142 = vsub.s32 1, %v141
    %v143 = vrot.slane %v134, %v142
    %v146 = vsub.f32 %v113, %v139
    %v147 = vsub.f32 %v115, %v143
    %v148 = vmul.f32 %v146, 1.442695
    %v149 = vpow.pop %v148
    %v150 = vmul.f32 %v147, 1.442695
    %v151 = vpow.pop %v150
    %154 = vset.pattern.permute.xlu0 0
    %155 = vperm.xlu0 %154, %v149
    %v156 = vpop.permute.xlu0 %155
    %157 = vset.pattern.permute.xlu0 0
    %158 = vperm.xlu0 %157, %v151
    %v159 = vpop.permute.xlu0 %158
    %v160 = vlaneseq
    %v161 = vshrl.u32 %v160, 7
    %v162 = vsub.s32 %v119, %v161
    %v163 = vrot.slane %v156, %v162
    %v164 = vlaneseq
    %v165 = vshrl.u32 %v164, 7
    %v166 = vsub.s32 %v119, %v165
    %v167 = vrot.slane %v159, %v166
    %v168 = vsel %vm128, %v167, %v163
    %v170 = vsel %vm131, %v168, 0.0
    %171 = vadd.xlane.f32.xlu0 %v170
    %v172 = vpop.xlane.xlu0 %171
    %v174 = vlaneseq
    %v175 = vshrl.u32 %v174, 7
    %v176 = vsub.s32 0, %v175
    %v177 = vrot.slane %v172, %v176
    %v178 = vlaneseq
    %v179 = vshrl.u32 %v178, 7
    %v180 = vsub.s32 1, %v179
    %v181 = vrot.slane %v172, %v180
    %v184 = vrcp.pop %v177
    %v185 = vmul.f32 %v149, %v184
    %v186 = vrcp.pop %v181
    %v187 = vmul.f32 %v151, %v186
    %189 = vset.pattern.permute.xlu0 0
    %190 = vperm.xlu0 %189, %v185
    %v191 = vpop.permute.xlu0 %190
    %194 = vset.pattern.permute.xlu0 0
    %195 = vperm.xlu0 %194, %v187
    %v196 = vpop.permute.xlu0 %195
    %v198 = vmul.f32 %v191, %v22
    %v199 = vmul.f32 %v196, %v23
    %v200 = vsel %vm59, %v198, 0.0
    %v201 = vrot.slane %v200, 4
    %v202 = vadd.f32 %v200, %v201
    %v203 = vrot.slane %v202, 2
    %v204 = vadd.f32 %v202, %v203
    %v205 = vrot.slane %v204, 1
    %v206 = vadd.f32 %v204, %v205
    %v207 = vsel %vm59, %v199, 0.0
    %v208 = vrot.slane %v207, 4
    %v209 = vadd.f32 %v207, %v208
    %v210 = vrot.slane %v209, 2
    %v211 = vadd.f32 %v209, %v210
    %v212 = vrot.slane %v211, 1
    %v213 = vadd.f32 %v211, %v212
    %v214 = vpack.c.bf16 %v206, %v206
    %v215 = vpack.c.bf16 %v213, %v213
    %v216 = vlaneseq
    %v217 = vshrl.u32 %v216, 7
    %v218 = vsub.s32 0, %v217
    %v219 = vrot.slane %v37, %v218
    %v222 = vunpack.c.l.b16 %v214
    %v223 = vunpack.c.l.b16 %v215
    %v224 = vsel %vm128, %v223, %v222
    %v225 = vpack.c.b16 %v224, %v224
    %v230 = vunpack.c.l.b16 %v31
    %v231 = vunpack.c.l.b16 %v32
    %v232 = vunpack.c.l.b16 %v33
    %v233 = vunpack.c.l.b16 %v34
    %v234 = vpack.c.b16 %v231, %v230
    %v235 = vpack.c.b16 %v233, %v232
    %v239 = vsel %vm59, %v225, 0
    %241 = vmatprep.subr.bf16.mxu0 0
    %242 = vmatpush1.bf16.msra.mxu0 %v234
    %243 = vmatprep.subr.bf16.mxu0 0
    %244 = vmatpush1.bf16.msra.mxu0 %v235
    %245 = vmatprep.subr.bf16.mxu0 0
    %246 = vmatpush1.bf16.msra.mxu0 0
    %247 = vmatprep.subr.bf16.mxu0 0
    %248 = vmatpush1.bf16.msra.mxu0 0
    %249 = vmatprep.subr.bf16.mxu0 0
    %250 = vmatpush1.bf16.msra.mxu0 0
    %251 = vmatprep.subr.bf16.mxu0 0
    %252 = vmatpush1.bf16.msra.mxu0 0
    %253 = vmatprep.subr.bf16.mxu0 0
    %254 = vmatpush1.bf16.msra.mxu0 0
    %255 = vmatprep.subr.bf16.mxu0 0
    %256 = vmatpush1.bf16.msra.mxu0 0
    %257 = vmatprep.subr.bf16.mxu0 0
    %258 = vmatpush1.bf16.msra.mxu0 0
    %259 = vmatprep.subr.bf16.mxu0 0
    %260 = vmatpush1.bf16.msra.mxu0 0
    %261 = vmatprep.subr.bf16.mxu0 0
    %262 = vmatpush1.bf16.msra.mxu0 0
    %263 = vmatprep.subr.bf16.mxu0 0
    %264 = vmatpush1.bf16.msra.mxu0 0
    %265 = vmatprep.subr.bf16.mxu0 0
    %266 = vmatpush1.bf16.msra.mxu0 0
    %267 = vmatprep.subr.bf16.mxu0 0
    %268 = vmatpush1.bf16.msra.mxu0 0
    %269 = vmatprep.subr.bf16.mxu0 0
    %270 = vmatpush1.bf16.msra.mxu0 0
    %271 = vmatprep.subr.bf16.mxu0 0
    %272 = vmatpush1.bf16.msra.mxu0 0
    %273 = vmatprep.mubr.bf16.mxu0 0
    %274 = vmatmul.mubr.bf16.gmra.mrb[0].mxu0 %v239
    %v275 = vpop.f32.mrb[0].mxu0
    %v276 = vadd.f32 %v219, %v275
    %v277 = vpop.f32.mrb[0].mxu0
    %v278 = vpop.f32.mrb[0].mxu0
    %v279 = vpop.f32.mrb[0].mxu0
    %280 = vdwg.mxu0
    %v281 = vmax.f32 %v276, 0.0
    %v282 = vpack.c.bf16 %v281, %v281
    %v283 = vld [vmem:[%s2] sm:$0xf]
    %v284 = vld [vmem:[%s2 + $0x4] sm:$0xf]
    %v285 = vld [vmem:[%s2 + $0x8] sm:$0xf]
    %v286 = vld [vmem:[%s2 + $0xc] sm:$0xf]
    %v287 = vld [vmem:[%s2 + $0x10] sm:$0xf]
    %v288 = vld [vmem:[%s2 + $0x14] sm:$0xf]
    %v289 = vld [vmem:[%s2 + $0x18] sm:$0xf]
    %v290 = vld [vmem:[%s2 + $0x1c] sm:$0xf]
    %v291 = vld [vmem:[%s2 + $0x20] sm:$0xf]
    %v292 = vld [vmem:[%s2 + $0x24] sm:$0xf]
    %v293 = vld [vmem:[%s2 + $0x28] sm:$0xf]
    %v294 = vld [vmem:[%s2 + $0x2c] sm:$0xf]
    %v295 = vld [vmem:[%s2 + $0x30] sm:$0xf]
    %v296 = vld [vmem:[%s2 + $0x34] sm:$0xf]
    %v297 = vld [vmem:[%s2 + $0x38] sm:$0xf]
    %v298 = vld [vmem:[%s2 + $0x3c] sm:$0xf]
    %v299 = vld [vmem:[%s4] sm:$0x1]
    %v301 = vlaneseq
    %v302 = vshrl.u32 %v301, 7
    %v303 = vsub.s32 0, %v302
    %v304 = vrot.slane %v299, %v303
    %v322 = vunpack.c.l.b16 %v283
    %v323 = vunpack.c.l.b16 %v284
    %v324 = vunpack.c.l.b16 %v285
    %v325 = vunpack.c.l.b16 %v286
    %v326 = vunpack.c.l.b16 %v287
    %v327 = vunpack.c.l.b16 %v288
    %v328 = vunpack.c.l.b16 %v289
    %v329 = vunpack.c.l.b16 %v290
    %v330 = vunpack.c.l.b16 %v291
    %v331 = vunpack.c.l.b16 %v292
    %v332 = vunpack.c.l.b16 %v293
    %v333 = vunpack.c.l.b16 %v294
    %v334 = vunpack.c.l.b16 %v295
    %v335 = vunpack.c.l.b16 %v296
    %v336 = vunpack.c.l.b16 %v297
    %v337 = vunpack.c.l.b16 %v298
    %v338 = vpack.c.b16 %v323, %v322
    %v339 = vpack.c.b16 %v325, %v324
    %v340 = vpack.c.b16 %v327, %v326
    %v341 = vpack.c.b16 %v329, %v328
    %v342 = vpack.c.b16 %v331, %v330
    %v343 = vpack.c.b16 %v333, %v332
    %v344 = vpack.c.b16 %v335, %v334
    %v345 = vpack.c.b16 %v337, %v336
    %354 = vmatprep.subr.bf16.mxu0 0
    %355 = vmatpush1.bf16.msra.mxu0 %v338
    %356 = vmatprep.subr.bf16.mxu0 0
    %357 = vmatpush1.bf16.msra.mxu0 %v339
    %358 = vmatprep.subr.bf16.mxu0 0
    %359 = vmatpush1.bf16.msra.mxu0 %v340
    %360 = vmatprep.subr.bf16.mxu0 0
    %361 = vmatpush1.bf16.msra.mxu0 %v341
    %362 = vmatprep.subr.bf16.mxu0 0
    %363 = vmatpush1.bf16.msra.mxu0 %v342
    %364 = vmatprep.subr.bf16.mxu0 0
    %365 = vmatpush1.bf16.msra.mxu0 %v343
    %366 = vmatprep.subr.bf16.mxu0 0
    %367 = vmatpush1.bf16.msra.mxu0 %v344
    %368 = vmatprep.subr.bf16.mxu0 0
    %369 = vmatpush1.bf16.msra.mxu0 %v345
    %370 = vmatprep.subr.bf16.mxu0 0
    %371 = vmatpush1.bf16.msra.mxu0 0
    %372 = vmatprep.subr.bf16.mxu0 0
    %373 = vmatpush1.bf16.msra.mxu0 0
    %374 = vmatprep.subr.bf16.mxu0 0
    %375 = vmatpush1.bf16.msra.mxu0 0
    %376 = vmatprep.subr.bf16.mxu0 0
    %377 = vmatpush1.bf16.msra.mxu0 0
    %378 = vmatprep.subr.bf16.mxu0 0
    %379 = vmatpush1.bf16.msra.mxu0 0
    %380 = vmatprep.subr.bf16.mxu0 0
    %381 = vmatpush1.bf16.msra.mxu0 0
    %382 = vmatprep.subr.bf16.mxu0 0
    %383 = vmatpush1.bf16.msra.mxu0 0
    %384 = vmatprep.subr.bf16.mxu0 0
    %385 = vmatpush1.bf16.msra.mxu0 0
    %386 = vmatprep.mubr.bf16.mxu0 0
    %387 = vmatmul.mubr.bf16.gmra.mrb[0].mxu0 %v282
    %v388 = vpop.f32.mrb[0].mxu0
    %v389 = vadd.f32 %v304, %v388
    %v390 = vpop.f32.mrb[0].mxu0
    %v391 = vpop.f32.mrb[0].mxu0
    %v392 = vpop.f32.mrb[0].mxu0
    %393 = vdwg.mxu0
    %vm394 = vcmask 254976
    %395 = vst.msk [vmem:[#allocation2] sm:$0x3] %vm394, %v389
    // Predicated region
    $region22: #{tpu_custom_call.1} parent=1 // pred_check
      _
    $region23: #{tpu_custom_call.1} parent=1 // pred_check_branch
      %397 = sbr.rel (0) target = $region25
    $region24: #{tpu_custom_call.1} parent=1 // pred_region
      %s399 = ssub.s32 32, 32
      %400 = vsyncadd [#allocation3], %s399
      %s402 = sshll.u32 [#allocation2], 4
      %s403 = int_to_ptr.vmem [resolvable:$true] %s402
      %405 = dma.vmem_to_hbm [thread:$0]  %s403, 32, %s5, [#allocation3]
    $region25: #{tpu_custom_call.1} parent=1 // pred_fallthru
      _
    // Predicated region
    $region26: #{tpu_custom_call.1} parent=1 // pred_check
      _
    $region27: #{tpu_custom_call.1} parent=1 // pred_check_branch
      %407 = sbr.rel (0) target = $region29
    $region28: #{tpu_custom_call.1} parent=1 // pred_region
      %408 = dma.done [#allocation3], 32
    $region29: #{tpu_custom_call.1} parent=1 // pred_fallthru
      _
    %409 = vsyncpa [#allocation3], 1

</llo_original>
